<compile_context>
chip_gen: v5e
topology: v5e:2x2
jax: 0.10.0
libtpu: 0.0.40
codegen_flags: <defaults>
</compile_context>

<pallas_src>
import jax
import jax.numpy as jnp
from jax.experimental import pallas as pl
from jax.experimental.pallas import tpu as pltpu


def _linear_kernel(x_ref, w_ref, b_ref, o_ref):
    # x_ref: (2, TR, 128) f32 VMEM -- feature-major, batch dense on (sublane, lane)
    # w_ref: (2,) f32 SMEM, b_ref: (1,) f32 SMEM (scalars, no VMEM tiles/DMAs)
    # o_ref: (TR, 128) f32 VMEM -- fully lane/sublane-dense, unmasked stores
    w0 = w_ref[0]
    w1 = w_ref[1]
    bias = b_ref[0]
    o_ref[...] = (x_ref[0] * w0 + x_ref[1] * w1 + bias).astype(o_ref.dtype)


def linear_forward(x, w, b, *, tr_max=2048):
    """x: (B, 2) f32, w: (2, 1) f32, b: (1, 1) f32 -> (B, 1) f32."""
    B = x.shape[0]
    assert x.shape[1] == 2 and w.shape == (2, 1) and b.shape == (1, 1)
    dtype = x.dtype

    LANES = 128
    R = pl.cdiv(B, LANES)   # number of 128-lane batch rows
    Bp = R * LANES

    # Feature-major, batch-dense view: xv[f, r, l] = x[r*128 + l, f].
    if Bp == B:
        xv = x.T.reshape(2, R, LANES)
    else:
        # Ragged tail only: pad batch to the next 128-lane row (<=127 rows);
        # pad + transpose form a single producer that may fuse into the kernel.
        xv = jnp.pad(x, ((0, Bp - B), (0, 0))).T.reshape(2, R, LANES)

    # Row tile: multiple of 8 sublanes (or the full row count). Sized so the
    # grid has >=2 parallel steps when possible (v7x dual TC) and each step
    # moves ~MiBs. VMEM at TR=2048: (2 MiB in + 1 MiB out) * 2 buffers = 6 MiB,
    # well under the default scoped limit on v5e/v6e/v7x.
    if R <= 8:
        tr = R                                            # single full block
    else:
        tr = min(tr_max, ((pl.cdiv(R, 2) + 7) // 8) * 8)  # >=2 grid steps
    grid = (pl.cdiv(R, tr),)

    out2d = pl.pallas_call(
        _linear_kernel,
        out_shape=jax.ShapeDtypeStruct((R, LANES), dtype),
        grid=grid,
        in_specs=[
            # (2, TR, 128): leading dim full, last two dims (8,128)-aligned
            # (or full) -> dense tiles, ragged last block masked by Pallas.
            pl.BlockSpec((2, tr, LANES), lambda i: (0, i, 0)),
            # 3 parameters -> SMEM scalars, passed whole to every grid step.
            pl.BlockSpec(memory_space=pltpu.MemorySpace.SMEM),
            pl.BlockSpec(memory_space=pltpu.MemorySpace.SMEM),
        ],
        out_specs=pl.BlockSpec((tr, LANES), lambda i: (i, 0)),
        compiler_params=pltpu.CompilerParams(
            # Independent batch tiles -> shard across TensorCores (v7x).
            dimension_semantics=("parallel",),
            # Allow XLA to fuse the transpose/reshape producer of operand 0
            # into the pallas_call input DMA instead of a standalone HBM copy.
            allow_input_fusion=[True, False, False],
        ),
        cost_estimate=pl.CostEstimate(
            flops=3 * Bp, transcendentals=0, bytes_accessed=12 * Bp),
    )(xv, w.reshape(2), b.reshape(1))

    # Back to the module's (B, 1) output convention. Row-major reshape keeps
    # batch order; this is the single remaining relayout.
    out = out2d.reshape(Bp, 1)
    if Bp != B:
        out = out[:B]
    return out


if __name__ == "__main__":
    key = jax.random.PRNGKey(0)
    kx, kw, kb = jax.random.split(key, 3)

    # Non-trivial w / b so the check exercises the matmul + bias path
    # (the module's zero init would make it pass trivially).
    w = jax.random.normal(kw, (2, 1), dtype=jnp.float32)
    b = jax.random.normal(kb, (1, 1), dtype=jnp.float32)

    fwd = jax.jit(linear_forward)

    # Small shape consistent with the module: batch=8, in_features=2
    # (exercises the ragged single-row path).
    x = jax.random.normal(kx, (8, 2), dtype=jnp.float32)
    out = jax.block_until_ready(fwd(x, w, b))
    ref = x @ w + b
    assert out.shape == (8, 1)
    assert jnp.allclose(out, ref, atol=1e-5, rtol=1e-5)

    # Aligned path: B % 128 == 0, single dense block, no wrapper pad.
    x2 = jax.random.normal(kx, (1024, 2), dtype=jnp.float32)
    out2 = jax.block_until_ready(fwd(x2, w, b))
    ref2 = x2 @ w + b
    assert out2.shape == (1024, 1)
    assert jnp.allclose(out2, ref2, atol=1e-5, rtol=1e-5)

    # Ragged multi-block path: 2 grid steps, masked partial last block.
    x3 = jax.random.normal(kx, (3000, 2), dtype=jnp.float32)
    out3 = jax.block_until_ready(fwd(x3, w, b))
    ref3 = x3 @ w + b
    assert out3.shape == (3000, 1)
    assert jnp.allclose(out3, ref3, atol=1e-5, rtol=1e-5)

    print("KERNEL_OK")
</pallas_src>

<mosaic_0001>
module attributes {stable_mosaic.version = 11 : i64} {
  func.func @_linear_kernel(%arg0: i32, %arg1: memref<2x1x128xf32, #tpu.memory_space<vmem>>, %arg2: memref<2xf32, #tpu.memory_space<smem>>, %arg3: memref<1xf32, #tpu.memory_space<smem>>, %arg4: memref<1x128xf32, #tpu.memory_space<vmem>>) attributes {dimension_semantics = [#tpu.dimension_semantics<parallel>], iteration_bounds = array<i64: 1>, scalar_prefetch = 0 : i64, scratch_operands = 0 : i64, tpu.core_type = #tpu.core_type<tc>, window_params = [{transform_indices = @transform_0, window_bounds = array<i64: 2, 1, 128>}, {transform_indices = @transform_1, window_bounds = array<i64: 2>}, {transform_indices = @transform_2, window_bounds = array<i64: 1>}, {transform_indices = @transform_3, window_bounds = array<i64: 1, 128>}]} {
    %c0 = arith.constant 0 : index
    %0 = memref.load %arg2[%c0] : memref<2xf32, #tpu.memory_space<smem>>
    %c1 = arith.constant 1 : index
    %1 = memref.load %arg2[%c1] : memref<2xf32, #tpu.memory_space<smem>>
    %c0_0 = arith.constant 0 : index
    %2 = memref.load %arg3[%c0_0] : memref<1xf32, #tpu.memory_space<smem>>
    %c0_1 = arith.constant 0 : index
    %c0_2 = arith.constant 0 : index
    %c0_3 = arith.constant 0 : index
    %3 = vector.load %arg1[%c0_1, %c0_2, %c0_3] : memref<2x1x128xf32, #tpu.memory_space<vmem>>, vector<1x1x128xf32>
    %4 = vector.shape_cast %3 : vector<1x1x128xf32> to vector<1x128xf32>
    %5 = vector.broadcast %0 : f32 to vector<1x128xf32>
    %6 = arith.mulf %4, %5 : vector<1x128xf32>
    %c1_4 = arith.constant 1 : index
    %c0_5 = arith.constant 0 : index
    %c0_6 = arith.constant 0 : index
    %7 = vector.load %arg1[%c1_4, %c0_5, %c0_6] : memref<2x1x128xf32, #tpu.memory_space<vmem>>, vector<1x1x128xf32>
    %8 = vector.shape_cast %7 : vector<1x1x128xf32> to vector<1x128xf32>
    %9 = vector.broadcast %1 : f32 to vector<1x128xf32>
    %10 = arith.mulf %8, %9 : vector<1x128xf32>
    %11 = arith.addf %6, %10 : vector<1x128xf32>
    %12 = vector.broadcast %2 : f32 to vector<1x128xf32>
    %13 = arith.addf %11, %12 : vector<1x128xf32>
    %c0_7 = arith.constant 0 : index
    %c0_8 = arith.constant 0 : index
    %14 = vector.load %arg4[%c0_7, %c0_8] : memref<1x128xf32, #tpu.memory_space<vmem>>, vector<1x128xf32>
    tpu.vector_store %arg4[%c0_7, %c0_8], %13 {strides = array<i32>} : memref<1x128xf32, #tpu.memory_space<vmem>>, vector<1x128xf32>,
    return
  }
  func.func @transform_0(%arg0: i32) -> (i32, i32, i32) {
    %c0_i32 = arith.constant 0 : i32
    %c0_i32_0 = arith.constant 0 : i32
    %c0_i32_1 = arith.constant 0 : i32
    return %c0_i32, %arg0, %c0_i32_0 : i32, i32, i32
  }
  func.func @transform_1(%arg0: i32) -> i32 {
    %c0_i32 = arith.constant 0 : i32
    %c0_i32_0 = arith.constant 0 : i32
    return %c0_i32 : i32
  }
  func.func @transform_2(%arg0: i32) -> i32 {
    %c0_i32 = arith.constant 0 : i32
    %c0_i32_0 = arith.constant 0 : i32
    return %c0_i32 : i32
  }
  func.func @transform_3(%arg0: i32) -> (i32, i32) {
    %c0_i32 = arith.constant 0 : i32
    %c0_i32_0 = arith.constant 0 : i32
    return %arg0, %c0_i32 : i32, i32
  }
}

</mosaic_0001>

<llo_original>
// kernel: linear_forward.1
$region0: #{linear_forward.1}
  #allocation0 [shape = 'u32[]', space=smem, size = 0x4, offset = 0x4, fixed_abs, tag = 'smem constant byte address 0x4 - core index']
  #allocation1 [shape = 'u32[72,128]{1,0:T(1,128)}', space=vmem, size = 0x9000, scoped, tag = 'internal scratch']
  #allocation2 [shape = 'f32[1]{0:T(128)S(6)}', space=smem, size = 0x200, scoped, tag = 'scoped memory for linear_forward.1']
  %s0 = inlined_call_operand.vmem [shape: f32[2,1,128], index: 0, kind: input, shape index: {}]
  %s1 = inlined_call_operand.vmem [shape: f32[2], index: 1, kind: input, shape index: {}]
  %s2 = inlined_call_operand.<no memory space> [shape: f32[1], index: 2, kind: input, shape index: {}]
  %s3 = inlined_call_operand.vmem [shape: f32[1,128], index: 3, kind: output, shape index: {}]
  %s4 = sld [smem:[#allocation0]]
  $region26: #{linear_forward.1} parent=0
    _
  %s6 = ssub.s32 1, %s4
  %s7 = scalar_select 0, %s6, %s4
  %8 = sst [smem:[#allocation2]] %s2
  $region1: #{linear_forward.1} parent=0
    #allocation3 [shape = 'u8[512]{0}', space=smem, size = 0x200, scoped, tag = 'input window, operand 1, single buffered']
    #allocation4 [shape = 's32[1]{0}', space=sflag, size = 0x4, scoped, tag = 'scoped memory for linear_forward.1']
    %9 = vsyncpa [#allocation4], 0
    // Predicated region
    $region2: #{linear_forward.1} parent=1 // pred_check
      _
    $region3: #{linear_forward.1} parent=1 // pred_check_branch
      %11 = sbr.rel (0) target = $region5
    $region4: #{linear_forward.1} parent=1 // pred_region
      _
    $region5: #{linear_forward.1} parent=1 // pred_fallthru
      _
    // Predicated region
    $region6: #{linear_forward.1} parent=1 // pred_check
      _
    $region7: #{linear_forward.1} parent=1 // pred_check_branch
      %13 = sbr.rel (0) target = $region9
    $region8: #{linear_forward.1} parent=1 // pred_region
      %15 = vsyncadd [#allocation4], 0
      %s17 = sshll.u32 %s1, 4
      %s18 = int_to_ptr.vmem [resolvable:$true] %s17
      %20 = dma.vmem_to_smem %s18, 16, [#allocation3], [#allocation4]
    $region9: #{linear_forward.1} parent=1 // pred_fallthru
      _
    // Predicated region
    $region10: #{linear_forward.1} parent=1 // pred_check
      _
    $region11: #{linear_forward.1} parent=1 // pred_check_branch
      %22 = sbr.rel (0) target = $region13
    $region12: #{linear_forward.1} parent=1 // pred_region
      _
    $region13: #{linear_forward.1} parent=1 // pred_fallthru
      _
    // Predicated region
    $region14: #{linear_forward.1} parent=1 // pred_check
      _
    $region15: #{linear_forward.1} parent=1 // pred_check_branch
      %24 = sbr.rel (0) target = $region17
    $region16: #{linear_forward.1} parent=1 // pred_region
      %26 = dma.done [#allocation4], 16
    $region17: #{linear_forward.1} parent=1 // pred_fallthru
      _
    %27 = sfence
    %s28 = sld [smem:[#allocation3]]
    %s29 = sld [smem:[#allocation3 + $0x1]]
    %s30 = sld [smem:[#allocation2]]
    %v31 = vld [vmem:[%s0] sm:$0x1]
    %v32 = vstv %s28
    %v33 = vmul.f32 %v31, %v32
    %s34 = scalar_lea.vmem %s0, 1
    %v35 = vld [vmem:[%s34] sm:$0x1]
    %v36 = vstv %s29
    %v37 = vmul.f32 %v35, %v36
    %v38 = vadd.f32 %v33, %v37
    %v39 = vstv %s30
    %v40 = vadd.f32 %v38, %v39
    %41 = vst [vmem:[%s3] sm:$0x1] %v40
    // Predicated region
    $region18: #{linear_forward.1} parent=1 // pred_check
      _
    $region19: #{linear_forward.1} parent=1 // pred_check_branch
      %43 = sbr.rel (0) target = $region21
    $region20: #{linear_forward.1} parent=1 // pred_region
      _
    $region21: #{linear_forward.1} parent=1 // pred_fallthru
      _
    // Predicated region
    $region22: #{linear_forward.1} parent=1 // pred_check
      _
    $region23: #{linear_forward.1} parent=1 // pred_check_branch
      %45 = sbr.rel (0) target = $region25
    $region24: #{linear_forward.1} parent=1 // pred_region
      _
    $region25: #{linear_forward.1} parent=1 // pred_fallthru
      _
    %46 = vsyncpa [#allocation4], 1

</llo_original>
